<compile_context>
chip_gen: v7x
topology: tpu7x:2x2x1
jax: 0.10.0
libtpu: 0.0.40
codegen_flags: <defaults>
</compile_context>

<pallas_src>
import jax
import jax.numpy as jnp
from jax.experimental import pallas as pl
from jax.experimental.pallas import tpu as pltpu

HIDDEN1 = 512
HIDDEN2 = 256
LANES = 128


def _mlp_kernel(x_ref, w1_ref, b1_ref, w2_ref, b2_ref, w3_ref, b3_ref, o_ref):
    # Fused 3-layer MLP on one batch tile; weights are VMEM-resident (constant
    # block index).  f32 x -> bf16 cast happens here (free VPU slot work).
    x = x_ref[...].astype(jnp.bfloat16)                                  # (bt, d_in)
    h1 = jnp.dot(x, w1_ref[...], preferred_element_type=jnp.float32) + b1_ref[...]
    h1 = jnp.maximum(h1, 0.0).astype(jnp.bfloat16)                       # ReLU in f32 -> bf16 for MXU
    h2 = jnp.dot(h1, w2_ref[...], preferred_element_type=jnp.float32) + b2_ref[...]
    h2 = jnp.maximum(h2, 0.0).astype(jnp.bfloat16)                       # ReLU in f32 -> bf16 for MXU
    # Dropout(p=0.3): identity in eval mode.
    # TODO(synk): training-mode dropout would need pltpu.prng_seed + prng_random_bits
    #             masking plus 1/(1-p) scaling.
    out = jnp.dot(h2, w3_ref[...], preferred_element_type=jnp.float32) + b3_ref[...]
    o_ref[...] = out.astype(o_ref.dtype)                                 # lane-dense (bt, 128k) f32 store


def _pick_batch_tile(B, *, min_steps=4, min_tile=128):
    """Largest tile (multiple of 16) dividing B while keeping >= min_steps grid
    steps (v7x: 2 TCs x >=2 steps each for DMA/compute overlap).  Small batches
    run as a single full-batch step."""
    if B < min_steps * min_tile:
        return B
    for t in (2048, 1024, 512, 256, 128):
        if B % t == 0 and B // t >= min_steps:
            return t
    return B


def prepare_params(params_f32):
    """One-time conversion OUTSIDE the hot path: bf16 weights, f32 biases,
    final layer zero-padded to a lane-dense (multiple-of-128) output width."""
    d_out = params_f32["w3"].shape[1]
    d_out_pad = max(LANES, ((d_out + LANES - 1) // LANES) * LANES)
    w3 = jnp.zeros((HIDDEN2, d_out_pad), jnp.bfloat16)
    w3 = w3.at[:, :d_out].set(params_f32["w3"].astype(jnp.bfloat16))
    b3 = jnp.zeros((1, d_out_pad), jnp.float32)
    b3 = b3.at[:, :d_out].set(params_f32["b3"].astype(jnp.float32))
    return {
        "w1": params_f32["w1"].astype(jnp.bfloat16),
        "b1": params_f32["b1"].astype(jnp.float32),
        "w2": params_f32["w2"].astype(jnp.bfloat16),
        "b2": params_f32["b2"].astype(jnp.float32),
        "w3": w3,
        "b3": b3,
    }


def stock_predictor_forward(x, kparams, output_size, *, batch_tile=None):
    """x: (B, input_size) f32.  kparams: output of prepare_params().  Returns (B, output_size) f32."""
    B, d_in = x.shape
    w1, b1 = kparams["w1"], kparams["b1"]
    w2, b2 = kparams["w2"], kparams["b2"]
    w3, b3 = kparams["w3"], kparams["b3"]
    d_out_pad = w3.shape[1]

    if batch_tile is None:
        batch_tile = _pick_batch_tile(B)
    assert B % batch_tile == 0, "batch_tile must divide the batch"
    assert batch_tile == B or batch_tile % 16 == 0, (
        "batch_tile must be a multiple of 16 (bf16 packs 2 rows/sublane) unless it equals B")

    grid = (B // batch_tile,)

    # Weights/biases: full blocks with a constant block index -> VMEM-resident,
    # no re-DMA across grid steps.  (pipeline_mode=pl.Buffered(1) would halve
    # their resident VMEM; unnecessary at <0.6 MiB total.)
    full = lambda shape: pl.BlockSpec(shape, lambda i: (0, 0))

    flops = 2 * B * (d_in * HIDDEN1 + HIDDEN1 * HIDDEN2 + HIDDEN2 * d_out_pad)
    bytes_accessed = (
        x.size * 4                                   # f32 input stream
        + (w1.size + w2.size + w3.size) * 2          # bf16 weights (one-time)
        + (b1.size + b2.size + b3.size) * 4          # f32 biases (one-time)
        + B * d_out_pad * 4)                         # f32 lane-dense output

    out_padded = pl.pallas_call(
        _mlp_kernel,
        out_shape=jax.ShapeDtypeStruct((B, d_out_pad), jnp.float32),
        grid_spec=pltpu.PrefetchScalarGridSpec(
            num_scalar_prefetch=0,
            grid=grid,
            in_specs=[
                pl.BlockSpec((batch_tile, d_in), lambda i: (i, 0)),   # x tile (streams)
                full((d_in, HIDDEN1)),                                # w1 (resident)
                full((1, HIDDEN1)),                                   # b1
                full((HIDDEN1, HIDDEN2)),                             # w2
                full((1, HIDDEN2)),                                   # b2
                full((HIDDEN2, d_out_pad)),                           # w3 (lane-padded)
                full((1, d_out_pad)),                                 # b3 (lane-padded)
            ],
            out_specs=pl.BlockSpec((batch_tile, d_out_pad), lambda i: (i, 0)),
        ),
        compiler_params=pltpu.CompilerParams(
            dimension_semantics=("parallel",),      # shard batch grid across TCs (v7x)
            vmem_limit_bytes=32 * 1024 * 1024,      # ample headroom; working set < 4 MiB
        ),
        cost_estimate=pl.CostEstimate(
            flops=flops, transcendentals=0, bytes_accessed=bytes_accessed),
    )(x, w1, b1, w2, b2, w3, b3)

    return out_padded[:, :output_size]


def init_params(key, input_size, output_size):
    """Deterministic PyTorch-style init (f32): U(-1/sqrt(fan_in), 1/sqrt(fan_in))."""
    def linear(k, fan_in, fan_out):
        kw, kb = jax.random.split(k)
        bound = 1.0 / jnp.sqrt(fan_in)
        w = jax.random.uniform(kw, (fan_in, fan_out), jnp.float32, -bound, bound)
        b = jax.random.uniform(kb, (1, fan_out), jnp.float32, -bound, bound)
        return w, b

    k1, k2, k3 = jax.random.split(key, 3)
    w1, b1 = linear(k1, input_size, HIDDEN1)
    w2, b2 = linear(k2, HIDDEN1, HIDDEN2)
    w3, b3 = linear(k3, HIDDEN2, output_size)
    return {"w1": w1, "b1": b1, "w2": w2, "b2": b2, "w3": w3, "b3": b3}


def _reference_f32(x, p):
    """True f32 PyTorch-semantics forward (eval mode; dropout = identity)."""
    h1 = jnp.maximum(jnp.dot(x, p["w1"]) + p["b1"], 0.0)
    h2 = jnp.maximum(jnp.dot(h1, p["w2"]) + p["b2"], 0.0)
    return jnp.dot(h2, p["w3"]) + p["b3"]


if __name__ == "__main__":
    key = jax.random.PRNGKey(0)
    kx, kp, kx2 = jax.random.split(key, 3)

    batch, input_size, output_size = 8, 32, 8
    params_f32 = init_params(kp, input_size, output_size)
    kparams = prepare_params(params_f32)           # one-time bf16 cast + lane padding

    # Tolerance note: the kernel runs bf16 weights/activations with f32
    # accumulation (inference quantization); compare vs the true f32 model.
    TOL = 3e-2

    # Small-batch path (single grid step).
    x = jax.random.normal(kx, (batch, input_size), jnp.float32)
    out = jax.block_until_ready(stock_predictor_forward(x, kparams, output_size))
    ref = _reference_f32(x, params_f32)
    assert out.shape == (batch, output_size)
    assert jnp.allclose(out, ref, atol=TOL, rtol=TOL)

    # Tiled path: 4-step grid exercises pipelining / v7x megacore sharding.
    big_batch = 512
    x2 = jax.random.normal(kx2, (big_batch, input_size), jnp.float32)
    out2 = jax.block_until_ready(stock_predictor_forward(x2, kparams, output_size))
    ref2 = _reference_f32(x2, params_f32)
    assert out2.shape == (big_batch, output_size)
    assert jnp.allclose(out2, ref2, atol=TOL, rtol=TOL)

    print("KERNEL_OK")
</pallas_src>

<mosaic_0001>
module attributes {stable_mosaic.version = 11 : i64} {
  func.func @_mlp_kernel(%arg0: i32, %arg1: memref<8x32xf32, #tpu.memory_space<vmem>>, %arg2: memref<32x512xbf16, #tpu.memory_space<vmem>>, %arg3: memref<1x512xf32, #tpu.memory_space<vmem>>, %arg4: memref<512x256xbf16, #tpu.memory_space<vmem>>, %arg5: memref<1x256xf32, #tpu.memory_space<vmem>>, %arg6: memref<256x128xbf16, #tpu.memory_space<vmem>>, %arg7: memref<1x128xf32, #tpu.memory_space<vmem>>, %arg8: memref<8x128xf32, #tpu.memory_space<vmem>>) attributes {dimension_semantics = [#tpu.dimension_semantics<parallel>], iteration_bounds = array<i64: 1>, scalar_prefetch = 0 : i64, scratch_operands = 0 : i64, tpu.core_type = #tpu.core_type<tc>, window_params = [{transform_indices = @transform_0, window_bounds = array<i64: 8, 32>}, {pipeline_mode = #tpu.pipeline_mode<synchronous>, transform_indices = @transform_1, window_bounds = array<i64: 32, 512>}, {pipeline_mode = #tpu.pipeline_mode<synchronous>, transform_indices = @transform_2, window_bounds = array<i64: 1, 512>}, {pipeline_mode = #tpu.pipeline_mode<synchronous>, transform_indices = @transform_3, window_bounds = array<i64: 512, 256>}, {pipeline_mode = #tpu.pipeline_mode<synchronous>, transform_indices = @transform_4, window_bounds = array<i64: 1, 256>}, {pipeline_mode = #tpu.pipeline_mode<synchronous>, transform_indices = @transform_5, window_bounds = array<i64: 256, 128>}, {pipeline_mode = #tpu.pipeline_mode<synchronous>, transform_indices = @transform_6, window_bounds = array<i64: 1, 128>}, {transform_indices = @transform_7, window_bounds = array<i64: 8, 128>}]} {
    %c0 = arith.constant 0 : index
    %c0_0 = arith.constant 0 : index
    %0 = vector.load %arg1[%c0, %c0_0] : memref<8x32xf32, #tpu.memory_space<vmem>>, vector<8x32xf32>
    %1 = arith.truncf %0 : vector<8x32xf32> to vector<8x32xbf16>
    %c0_1 = arith.constant 0 : index
    %c0_2 = arith.constant 0 : index
    %2 = vector.load %arg2[%c0_1, %c0_2] : memref<32x512xbf16, #tpu.memory_space<vmem>>, vector<32x512xbf16>
    %cst = arith.constant dense<0.000000e+00> : vector<8x512xf32>
    %3 = tpu.matmul %1, %2, %cst {dimension_numbers = #tpu.dot_dimension_numbers<[1], [0], [0], [1], [0, 0, 1, 1], [], []>} : vector<8x32xbf16>, vector<32x512xbf16>, vector<8x512xf32> -> vector<8x512xf32>
    %c0_3 = arith.constant 0 : index
    %c0_4 = arith.constant 0 : index
    %4 = vector.load %arg3[%c0_3, %c0_4] : memref<1x512xf32, #tpu.memory_space<vmem>>, vector<1x512xf32>
    %5 = vector.broadcast %4 : vector<1x512xf32> to vector<8x512xf32>
    %6 = arith.addf %3, %5 : vector<8x512xf32>
    %cst_5 = arith.constant 0.000000e+00 : f32
    %7 = vector.broadcast %cst_5 : f32 to vector<8x512xf32>
    %8 = arith.maximumf %6, %7 : vector<8x512xf32>
    %9 = arith.truncf %8 : vector<8x512xf32> to vector<8x512xbf16>
    %c0_6 = arith.constant 0 : index
    %c0_7 = arith.constant 0 : index
    %10 = vector.load %arg4[%c0_6, %c0_7] : memref<512x256xbf16, #tpu.memory_space<vmem>>, vector<512x256xbf16>
    %cst_8 = arith.constant dense<0.000000e+00> : vector<8x256xf32>
    %11 = tpu.matmul %9, %10, %cst_8 {dimension_numbers = #tpu.dot_dimension_numbers<[1], [0], [0], [1], [0, 0, 1, 1], [], []>} : vector<8x512xbf16>, vector<512x256xbf16>, vector<8x256xf32> -> vector<8x256xf32>
    %c0_9 = arith.constant 0 : index
    %c0_10 = arith.constant 0 : index
    %12 = vector.load %arg5[%c0_9, %c0_10] : memref<1x256xf32, #tpu.memory_space<vmem>>, vector<1x256xf32>
    %13 = vector.broadcast %12 : vector<1x256xf32> to vector<8x256xf32>
    %14 = arith.addf %11, %13 : vector<8x256xf32>
    %cst_11 = arith.constant 0.000000e+00 : f32
    %15 = vector.broadcast %cst_11 : f32 to vector<8x256xf32>
    %16 = arith.maximumf %14, %15 : vector<8x256xf32>
    %17 = arith.truncf %16 : vector<8x256xf32> to vector<8x256xbf16>
    %c0_12 = arith.constant 0 : index
    %c0_13 = arith.constant 0 : index
    %18 = vector.load %arg6[%c0_12, %c0_13] : memref<256x128xbf16, #tpu.memory_space<vmem>>, vector<256x128xbf16>
    %cst_14 = arith.constant dense<0.000000e+00> : vector<8x128xf32>
    %19 = tpu.matmul %17, %18, %cst_14 {dimension_numbers = #tpu.dot_dimension_numbers<[1], [0], [0], [1], [0, 0, 1, 1], [], []>} : vector<8x256xbf16>, vector<256x128xbf16>, vector<8x128xf32> -> vector<8x128xf32>
    %c0_15 = arith.constant 0 : index
    %c0_16 = arith.constant 0 : index
    %20 = vector.load %arg7[%c0_15, %c0_16] : memref<1x128xf32, #tpu.memory_space<vmem>>, vector<1x128xf32>
    %21 = vector.broadcast %20 : vector<1x128xf32> to vector<8x128xf32>
    %22 = arith.addf %19, %21 : vector<8x128xf32>
    %c0_17 = arith.constant 0 : index
    %c0_18 = arith.constant 0 : index
    %23 = vector.load %arg8[%c0_17, %c0_18] : memref<8x128xf32, #tpu.memory_space<vmem>>, vector<8x128xf32>
    tpu.vector_store %arg8[%c0_17, %c0_18], %22 {strides = array<i32>} : memref<8x128xf32, #tpu.memory_space<vmem>>, vector<8x128xf32>,
    return
  }
  func.func @transform_0(%arg0: i32) -> (i32, i32) {
    %c0_i32 = arith.constant 0 : i32
    %c0_i32_0 = arith.constant 0 : i32
    return %arg0, %c0_i32 : i32, i32
  }
  func.func @transform_1(%arg0: i32) -> (i32, i32) {
    %c0_i32 = arith.constant 0 : i32
    %c0_i32_0 = arith.constant 0 : i32
    %c0_i32_1 = arith.constant 0 : i32
    return %c0_i32, %c0_i32_0 : i32, i32
  }
  func.func @transform_2(%arg0: i32) -> (i32, i32) {
    %c0_i32 = arith.constant 0 : i32
    %c0_i32_0 = arith.constant 0 : i32
    %c0_i32_1 = arith.constant 0 : i32
    return %c0_i32, %c0_i32_0 : i32, i32
  }
  func.func @transform_3(%arg0: i32) -> (i32, i32) {
    %c0_i32 = arith.constant 0 : i32
    %c0_i32_0 = arith.constant 0 : i32
    %c0_i32_1 = arith.constant 0 : i32
    return %c0_i32, %c0_i32_0 : i32, i32
  }
  func.func @transform_4(%arg0: i32) -> (i32, i32) {
    %c0_i32 = arith.constant 0 : i32
    %c0_i32_0 = arith.constant 0 : i32
    %c0_i32_1 = arith.constant 0 : i32
    return %c0_i32, %c0_i32_0 : i32, i32
  }
  func.func @transform_5(%arg0: i32) -> (i32, i32) {
    %c0_i32 = arith.constant 0 : i32
    %c0_i32_0 = arith.constant 0 : i32
    %c0_i32_1 = arith.constant 0 : i32
    return %c0_i32, %c0_i32_0 : i32, i32
  }
  func.func @transform_6(%arg0: i32) -> (i32, i32) {
    %c0_i32 = arith.constant 0 : i32
    %c0_i32_0 = arith.constant 0 : i32
    %c0_i32_1 = arith.constant 0 : i32
    return %c0_i32, %c0_i32_0 : i32, i32
  }
  func.func @transform_7(%arg0: i32) -> (i32, i32) {
    %c0_i32 = arith.constant 0 : i32
    %c0_i32_0 = arith.constant 0 : i32
    return %arg0, %c0_i32 : i32, i32
  }
}

</mosaic_0001>

<llo_original>
// kernel: tpu_custom_call.1
$region0: #{tpu_custom_call.1}
  #allocation0 [shape = 'u32[]', space=smem, size = 0x4, offset = 0x4, fixed_abs, tag = 'smem constant byte address 0x4 - core index']
  #allocation1 [shape = 'u32[144,128]{1,0:T(1,128)}', space=vmem, size = 0x12000, scoped, tag = 'internal scratch']
  %s0 = inlined_call_operand.hbm [shape: f32[8,32], index: 0, kind: input, shape index: {}]
  %s1 = inlined_call_operand.hbm [shape: bf16[32,512], index: 1, kind: input, shape index: {}]
  %s2 = inlined_call_operand.vmem [shape: f32[1,512], index: 2, kind: input, shape index: {}]
  %s3 = inlined_call_operand.hbm [shape: bf16[512,256], index: 3, kind: input, shape index: {}]
  %s4 = inlined_call_operand.vmem [shape: f32[1,256], index: 4, kind: input, shape index: {}]
  %s5 = inlined_call_operand.hbm [shape: bf16[256,128], index: 5, kind: input, shape index: {}]
  %s6 = inlined_call_operand.vmem [shape: f32[1,128], index: 6, kind: input, shape index: {}]
  %s7 = inlined_call_operand.hbm [shape: f32[8,128], index: 7, kind: output, shape index: {}]
  %s8 = sld [smem:[#allocation0]]
  $region54: #{tpu_custom_call.1} parent=0
    _
  %s10 = ssub.s32 1, %s8
  %s11 = scalar_select 0, %s10, %s8
  $region1: #{tpu_custom_call.1} parent=0
    #allocation2 [shape = 'u8[4096]{0}', space=vmem, size = 0x1000, scoped, tag = 'input window, operand 0, single buffered']
    #allocation3 [shape = 's32[1]{0}', space=sflag, size = 0x4, scoped, tag = 'scoped memory for tpu_custom_call.1']
    #allocation4 [shape = 's32[1]{0}', space=sflag, size = 0x4, scoped, tag = 'scoped memory for tpu_custom_call.1']
    #allocation5 [shape = 'u8[32768]{0}', space=vmem, size = 0x8000, scoped, tag = 'input window, operand 1, single buffered']
    #allocation6 [shape = 's32[1]{0}', space=sflag, size = 0x4, scoped, tag = 'scoped memory for tpu_custom_call.1']
    #allocation7 [shape = 'u8[262144]{0}', space=vmem, size = 0x40000, scoped, tag = 'input window, operand 3, single buffered']
    #allocation8 [shape = 'u8[65536]{0}', space=vmem, size = 0x10000, scoped, tag = 'input window, operand 5, single buffered']
    #allocation9 [shape = 's32[1]{0}', space=sflag, size = 0x4, scoped, tag = 'scoped memory for tpu_custom_call.1']
    #allocation10 [shape = 'u8[4096]{0}', space=vmem, size = 0x1000, scoped, tag = 'output window, operand 0, single buffered']
    %12 = vsyncpa [#allocation3], 0
    %13 = vsyncpa [#allocation6], 0
    %14 = vsyncpa [#allocation9], 0
    %15 = vsyncpa [#allocation4], 0
    // Predicated region
    $region2: #{tpu_custom_call.1} parent=1 // pred_check
      _
    $region3: #{tpu_custom_call.1} parent=1 // pred_check_branch
      %17 = sbr.rel (0) target = $region5
    $region4: #{tpu_custom_call.1} parent=1 // pred_region
      %s19 = ssub.s32 128, 128
      %20 = vsyncadd [#allocation3], %s19
      %s22 = sshll.u32 [#allocation2], 4
      %s23 = int_to_ptr.vmem [resolvable:$true] %s22
      %25 = dma.hbm_to_vmem [thread:$0]  %s0, 128, %s23, [#allocation3]
    $region5: #{tpu_custom_call.1} parent=1 // pred_fallthru
      _
    // Predicated region
    $region6: #{tpu_custom_call.1} parent=1 // pred_check
      _
    $region7: #{tpu_custom_call.1} parent=1 // pred_check_branch
      %27 = sbr.rel (0) target = $region9
    $region8: #{tpu_custom_call.1} parent=1 // pred_region
      %s29 = ssub.s32 1024, 1024
      %30 = vsyncadd [#allocation6], %s29
      %s31 = sshll.u32 [#allocation5], 4
      %s32 = int_to_ptr.vmem [resolvable:$true] %s31
      %37 = dma.hbm_to_vmem [thread:$0]  %s1, 1024, %s32, [#allocation6], 256, 256, 16
    $region9: #{tpu_custom_call.1} parent=1 // pred_fallthru
      _
    // Predicated region
    $region10: #{tpu_custom_call.1} parent=1 // pred_check
      _
    $region11: #{tpu_custom_call.1} parent=1 // pred_check_branch
      %39 = sbr.rel (0) target = $region13
    $region12: #{tpu_custom_call.1} parent=1 // pred_region
      _
    $region13: #{tpu_custom_call.1} parent=1 // pred_fallthru
      _
    // Predicated region
    $region14: #{tpu_custom_call.1} parent=1 // pred_check
      _
    $region15: #{tpu_custom_call.1} parent=1 // pred_check_branch
      %41 = sbr.rel (0) target = $region17
    $region16: #{tpu_custom_call.1} parent=1 // pred_region
      %s43 = ssub.s32 8192, 8192
      %44 = vsyncadd [#allocation6], %s43
      %s45 = sshll.u32 [#allocation7], 4
      %s46 = int_to_ptr.vmem [resolvable:$true] %s45
      %51 = dma.hbm_to_vmem [thread:$0]  %s3, 8192, %s46, [#allocation6], 128, 128, 8
    $region17: #{tpu_custom_call.1} parent=1 // pred_fallthru
      _
    // Predicated region
    $region18: #{tpu_custom_call.1} parent=1 // pred_check
      _
    $region19: #{tpu_custom_call.1} parent=1 // pred_check_branch
      %53 = sbr.rel (0) target = $region21
    $region20: #{tpu_custom_call.1} parent=1 // pred_region
      _
    $region21: #{tpu_custom_call.1} parent=1 // pred_fallthru
      _
    // Predicated region
    $region22: #{tpu_custom_call.1} parent=1 // pred_check
      _
    $region23: #{tpu_custom_call.1} parent=1 // pred_check_branch
      %55 = sbr.rel (0) target = $region25
    $region24: #{tpu_custom_call.1} parent=1 // pred_region
      %s57 = ssub.s32 2048, 2048
      %58 = vsyncadd [#allocation9], %s57
      %s59 = sshll.u32 [#allocation8], 4
      %s60 = int_to_ptr.vmem [resolvable:$true] %s59
      %65 = dma.hbm_to_vmem [thread:$0]  %s5, 2048, %s60, [#allocation9], 64, 64, 4
    $region25: #{tpu_custom_call.1} parent=1 // pred_fallthru
      _
    // Predicated region
    $region26: #{tpu_custom_call.1} parent=1 // pred_check
      _
    $region27: #{tpu_custom_call.1} parent=1 // pred_check_branch
      %67 = sbr.rel (0) target = $region29
    $region28: #{tpu_custom_call.1} parent=1 // pred_region
      _
    $region29: #{tpu_custom_call.1} parent=1 // pred_fallthru
      _
    // Predicated region
    $region30: #{tpu_custom_call.1} parent=1 // pred_check
      _
    $region31: #{tpu_custom_call.1} parent=1 // pred_check_branch
      %69 = sbr.rel (0) target = $region33
    $region32: #{tpu_custom_call.1} parent=1 // pred_region
      %70 = dma.done [#allocation3], 128
    $region33: #{tpu_custom_call.1} parent=1 // pred_fallthru
      _
    // Predicated region
    $region34: #{tpu_custom_call.1} parent=1 // pred_check
      _
    $region35: #{tpu_custom_call.1} parent=1 // pred_check_branch
      %72 = sbr.rel (0) target = $region37
    $region36: #{tpu_custom_call.1} parent=1 // pred_region
      %73 = dma.done [#allocation6], 1024
    $region37: #{tpu_custom_call.1} parent=1 // pred_fallthru
      _
    // Predicated region
    $region38: #{tpu_custom_call.1} parent=1 // pred_check
      _
    $region39: #{tpu_custom_call.1} parent=1 // pred_check_branch
      %75 = sbr.rel (0) target = $region41
    $region40: #{tpu_custom_call.1} parent=1 // pred_region
      %76 = dma.done [#allocation6], 8192
    $region41: #{tpu_custom_call.1} parent=1 // pred_fallthru
      _
    // Predicated region
    $region42: #{tpu_custom_call.1} parent=1 // pred_check
      _
    $region43: #{tpu_custom_call.1} parent=1 // pred_check_branch
      %78 = sbr.rel (0) target = $region45
    $region44: #{tpu_custom_call.1} parent=1 // pred_region
      %79 = dma.done [#allocation9], 2048
    $region45: #{tpu_custom_call.1} parent=1 // pred_fallthru
      _
    %v81 = vld [vmem:[#allocation2] sm:$0xff]
    %v82 = vpack.c.bf16 %v81, %v81
    %v83 = vld [vmem:[#allocation5] sm:$0xff]
    %v84 = vld [vmem:[#allocation5 + $0x8] sm:$0xff]
    %v85 = vld [vmem:[#allocation5 + $0x10] sm:$0xff]
    %v86 = vld [vmem:[#allocation5 + $0x18] sm:$0xff]
    %v87 = vld [vmem:[#allocation5 + $0x20] sm:$0xff]
    %v88 = vld [vmem:[#allocation5 + $0x28] sm:$0xff]
    %v89 = vld [vmem:[#allocation5 + $0x30] sm:$0xff]
    %v90 = vld [vmem:[#allocation5 + $0x38] sm:$0xff]
    %v91 = vld [vmem:[%s2] sm:$0xf]
    %v93 = vlaneseq
    %v94 = vshrl.u32 %v93, 7
    %v95 = vsub.s32 0, %v94
    %v96 = vrot.slane %v91, %v95
    %v97 = vlaneseq
    %v98 = vshrl.u32 %v97, 7
    %v99 = vsub.s32 1, %v98
    %v100 = vrot.slane %v91, %v99
    %v101 = vlaneseq
    %v102 = vshrl.u32 %v101, 7
    %v103 = vsub.s32 2, %v102
    %v104 = vrot.slane %v91, %v103
    %v105 = vlaneseq
    %v106 = vshrl.u32 %v105, 7
    %v107 = vsub.s32 3, %v106
    %v108 = vrot.slane %v91, %v107
    %v121 = vunpack.c.l.b16 %v83
    %v122 = vunpack.c.h.b16 %v83
    %v123 = vunpack.c.l.b16 %v84
    %v124 = vunpack.c.h.b16 %v84
    %v125 = vunpack.c.l.b16 %v85
    %v126 = vunpack.c.h.b16 %v85
    %v127 = vunpack.c.l.b16 %v86
    %v128 = vunpack.c.h.b16 %v86
    %v129 = vunpack.c.l.b16 %v87
    %v130 = vunpack.c.h.b16 %v87
    %v131 = vunpack.c.l.b16 %v88
    %v132 = vunpack.c.h.b16 %v88
    %v133 = vunpack.c.l.b16 %v89
    %v134 = vunpack.c.h.b16 %v89
    %v135 = vunpack.c.l.b16 %v90
    %v136 = vunpack.c.h.b16 %v90
    %v137 = vpack.c.b16 %v125, %v121
    %v138 = vpack.c.b16 %v126, %v122
    %v139 = vpack.c.b16 %v127, %v123
    %v140 = vpack.c.b16 %v128, %v124
    %v141 = vpack.c.b16 %v133, %v129
    %v142 = vpack.c.b16 %v134, %v130
    %v143 = vpack.c.b16 %v135, %v131
    %v144 = vpack.c.b16 %v136, %v132
    %vm153 = vcmask 261120
    %v155 = vsel %vm153, %v82, 0
    %157 = vmatprep.subr.bf16.mxu0 %v138
    %158 = vmatpush1.bf16.msra.mxu0 %v137
    %159 = vmatprep.subr.bf16.mxu0 %v142
    %160 = vmatpush1.bf16.msra.mxu0 %v141
    %161 = vmatprep.subr.bf16.mxu0 0
    %162 = vmatpush1.bf16.msra.mxu0 0
    %163 = vmatprep.subr.bf16.mxu0 0
    %164 = vmatpush1.bf16.msra.mxu0 0
    %165 = vmatprep.subr.bf16.mxu0 0
    %166 = vmatpush1.bf16.msra.mxu0 0
    %167 = vmatprep.subr.bf16.mxu0 0
    %168 = vmatpush1.bf16.msra.mxu0 0
    %169 = vmatprep.subr.bf16.mxu0 0
    %170 = vmatpush1.bf16.msra.mxu0 0
    %171 = vmatprep.subr.bf16.mxu0 0
    %172 = vmatpush1.bf16.msra.mxu0 0
    %173 = vmatprep.subr.bf16.mxu0 0
    %174 = vmatpush1.bf16.msra.mxu0 0
    %175 = vmatprep.subr.bf16.mxu0 0
    %176 = vmatpush1.bf16.msra.mxu0 0
    %177 = vmatprep.subr.bf16.mxu0 0
    %178 = vmatpush1.bf16.msra.mxu0 0
    %179 = vmatprep.subr.bf16.mxu0 0
    %180 = vmatpush1.bf16.msra.mxu0 0
    %181 = vmatprep.subr.bf16.mxu0 0
    %182 = vmatpush1.bf16.msra.mxu0 0
    %183 = vmatprep.subr.bf16.mxu0 0
    %184 = vmatpush1.bf16.msra.mxu0 0
    %185 = vmatprep.subr.bf16.mxu0 0
    %186 = vmatpush1.bf16.msra.mxu0 0
    %187 = vmatprep.subr.bf16.mxu0 0
    %188 = vmatpush1.bf16.msra.mxu0 0
    %189 = vmatprep.mubr.bf16.mxu0 0
    %190 = vmatmul.mubr.bf16.gmra.mrb[0].mxu0 %v155
    %v191 = vpop.f32.mrb[0].mxu0
    %v192 = vadd.f32 %v96, %v191
    %v193 = vpop.f32.mrb[0].mxu0
    %v194 = vadd.f32 %v100, %v193
    %v195 = vpop.f32.mrb[0].mxu0
    %v196 = vpop.f32.mrb[0].mxu0
    %197 = vdwg.mxu0
    %198 = vmatprep.subr.bf16.mxu0 %v140
    %199 = vmatpush1.bf16.msra.mxu0 %v139
    %200 = vmatprep.subr.bf16.mxu0 %v144
    %201 = vmatpush1.bf16.msra.mxu0 %v143
    %202 = vmatprep.subr.bf16.mxu0 0
    %203 = vmatpush1.bf16.msra.mxu0 0
    %204 = vmatprep.subr.bf16.mxu0 0
    %205 = vmatpush1.bf16.msra.mxu0 0
    %206 = vmatprep.subr.bf16.mxu0 0
    %207 = vmatpush1.bf16.msra.mxu0 0
    %208 = vmatprep.subr.bf16.mxu0 0
    %209 = vmatpush1.bf16.msra.mxu0 0
    %210 = vmatprep.subr.bf16.mxu0 0
    %211 = vmatpush1.bf16.msra.mxu0 0
    %212 = vmatprep.subr.bf16.mxu0 0
    %213 = vmatpush1.bf16.msra.mxu0 0
    %214 = vmatprep.subr.bf16.mxu0 0
    %215 = vmatpush1.bf16.msra.mxu0 0
    %216 = vmatprep.subr.bf16.mxu0 0
    %217 = vmatpush1.bf16.msra.mxu0 0
    %218 = vmatprep.subr.bf16.mxu0 0
    %219 = vmatpush1.bf16.msra.mxu0 0
    %220 = vmatprep.subr.bf16.mxu0 0
    %221 = vmatpush1.bf16.msra.mxu0 0
    %222 = vmatprep.subr.bf16.mxu0 0
    %223 = vmatpush1.bf16.msra.mxu0 0
    %224 = vmatprep.subr.bf16.mxu0 0
    %225 = vmatpush1.bf16.msra.mxu0 0
    %226 = vmatprep.subr.bf16.mxu0 0
    %227 = vmatpush1.bf16.msra.mxu0 0
    %228 = vmatprep.subr.bf16.mxu0 0
    %229 = vmatpush1.bf16.msra.mxu0 0
    %230 = vmatprep.mubr.bf16.mxu0 0
    %231 = vmatmul.mubr.bf16.gmra.mrb[0].mxu0 %v155
    %v232 = vpop.f32.mrb[0].mxu0
    %v233 = vadd.f32 %v104, %v232
    %v234 = vpop.f32.mrb[0].mxu0
    %v235 = vadd.f32 %v108, %v234
    %v236 = vpop.f32.mrb[0].mxu0
    %v237 = vpop.f32.mrb[0].mxu0
    %238 = vdwg.mxu0
    %v239 = vmax.f32 %v192, 0.0
    %v240 = vmax.f32 %v194, 0.0
    %v241 = vmax.f32 %v233, 0.0
    %v242 = vmax.f32 %v235, 0.0
    %v243 = vpack.c.bf16 %v239, %v239
    %v244 = vpack.c.bf16 %v240, %v240
    %v245 = vpack.c.bf16 %v241, %v241
    %v246 = vpack.c.bf16 %v242, %v242
    %v247 = vld [vmem:[#allocation7] sm:$0xff]
    %v248 = vld [vmem:[#allocation7 + $0x8] sm:$0xff]
    %v249 = vld [vmem:[#allocation7 + $0x10] sm:$0xff]
    %v250 = vld [vmem:[#allocation7 + $0x18] sm:$0xff]
    %v251 = vld [vmem:[#allocation7 + $0x20] sm:$0xff]
    %v252 = vld [vmem:[#allocation7 + $0x28] sm:$0xff]
    %v253 = vld [vmem:[#allocation7 + $0x30] sm:$0xff]
    %v254 = vld [vmem:[#allocation7 + $0x38] sm:$0xff]
    %v255 = vld [vmem:[#allocation7 + $0x40] sm:$0xff]
    %v256 = vld [vmem:[#allocation7 + $0x48] sm:$0xff]
    %v257 = vld [vmem:[#allocation7 + $0x50] sm:$0xff]
    %v258 = vld [vmem:[#allocation7 + $0x58] sm:$0xff]
    %v259 = vld [vmem:[#allocation7 + $0x60] sm:$0xff]
    %v260 = vld [vmem:[#allocation7 + $0x68] sm:$0xff]
    %v261 = vld [vmem:[#allocation7 + $0x70] sm:$0xff]
    %v262 = vld [vmem:[#allocation7 + $0x78] sm:$0xff]
    %v263 = vld [vmem:[#allocation7 + $0x80] sm:$0xff]
    %v264 = vld [vmem:[#allocation7 + $0x88] sm:$0xff]
    %v265 = vld [vmem:[#allocation7 + $0x90] sm:$0xff]
    %v266 = vld [vmem:[#allocation7 + $0x98] sm:$0xff]
    %v267 = vld [vmem:[#allocation7 + $0xa0] sm:$0xff]
    %v268 = vld [vmem:[#allocation7 + $0xa8] sm:$0xff]
    %v269 = vld [vmem:[#allocation7 + $0xb0] sm:$0xff]
    %v270 = vld [vmem:[#allocation7 + $0xb8] sm:$0xff]
    %v271 = vld [vmem:[#allocation7 + $0xc0] sm:$0xff]
    %v272 = vld [vmem:[#allocation7 + $0xc8] sm:$0xff]
    %v273 = vld [vmem:[#allocation7 + $0xd0] sm:$0xff]
    %v274 = vld [vmem:[#allocation7 + $0xd8] sm:$0xff]
    %v275 = vld [vmem:[#allocation7 + $0xe0] sm:$0xff]
    %v276 = vld [vmem:[#allocation7 + $0xe8] sm:$0xff]
    %v277 = vld [vmem:[#allocation7 + $0xf0] sm:$0xff]
    %v278 = vld [vmem:[#allocation7 + $0xf8] sm:$0xff]
    %v279 = vld [vmem:[#allocation7 + $0x100] sm:$0xff]
    %v280 = vld [vmem:[#allocation7 + $0x108] sm:$0xff]
    %v281 = vld [vmem:[#allocation7 + $0x110] sm:$0xff]
    %v282 = vld [vmem:[#allocation7 + $0x118] sm:$0xff]
    %v283 = vld [vmem:[#allocation7 + $0x120] sm:$0xff]
    %v284 = vld [vmem:[#allocation7 + $0x128] sm:$0xff]
    %v285 = vld [vmem:[#allocation7 + $0x130] sm:$0xff]
    %v286 = vld [vmem:[#allocation7 + $0x138] sm:$0xff]
    %v287 = vld [vmem:[#allocation7 + $0x140] sm:$0xff]
    %v288 = vld [vmem:[#allocation7 + $0x148] sm:$0xff]
    %v289 = vld [vmem:[#allocation7 + $0x150] sm:$0xff]
    %v290 = vld [vmem:[#allocation7 + $0x158] sm:$0xff]
    %v291 = vld [vmem:[#allocation7 + $0x160] sm:$0xff]
    %v292 = vld [vmem:[#allocation7 + $0x168] sm:$0xff]
    %v293 = vld [vmem:[#allocation7 + $0x170] sm:$0xff]
    %v294 = vld [vmem:[#allocation7 + $0x178] sm:$0xff]
    %v295 = vld [vmem:[#allocation7 + $0x180] sm:$0xff]
    %v296 = vld [vmem:[#allocation7 + $0x188] sm:$0xff]
    %v297 = vld [vmem:[#allocation7 + $0x190] sm:$0xff]
    %v298 = vld [vmem:[#allocation7 + $0x198] sm:$0xff]
    %v299 = vld [vmem:[#allocation7 + $0x1a0] sm:$0xff]
    %v300 = vld [vmem:[#allocation7 + $0x1a8] sm:$0xff]
    %v301 = vld [vmem:[#allocation7 + $0x1b0] sm:$0xff]
    %v302 = vld [vmem:[#allocation7 + $0x1b8] sm:$0xff]
    %v303 = vld [vmem:[#allocation7 + $0x1c0] sm:$0xff]
    %v304 = vld [vmem:[#allocation7 + $0x1c8] sm:$0xff]
    %v305 = vld [vmem:[#allocation7 + $0x1d0] sm:$0xff]
    %v306 = vld [vmem:[#allocation7 + $0x1d8] sm:$0xff]
    %v307 = vld [vmem:[#allocation7 + $0x1e0] sm:$0xff]
    %v308 = vld [vmem:[#allocation7 + $0x1e8] sm:$0xff]
    %v309 = vld [vmem:[#allocation7 + $0x1f0] sm:$0xff]
    %v310 = vld [vmem:[#allocation7 + $0x1f8] sm:$0xff]
    %v311 = vld [vmem:[%s4] sm:$0x3]
    %v313 = vlaneseq
    %v314 = vshrl.u32 %v313, 7
    %v315 = vsub.s32 0, %v314
    %v316 = vrot.slane %v311, %v315
    %v317 = vlaneseq
    %v318 = vshrl.u32 %v317, 7
    %v319 = vsub.s32 1, %v318
    %v320 = vrot.slane %v311, %v319
    %v387 = vunpack.c.l.b16 %v247
    %v388 = vunpack.c.h.b16 %v247
    %v389 = vunpack.c.l.b16 %v248
    %v390 = vunpack.c.h.b16 %v248
    %v391 = vunpack.c.l.b16 %v249
    %v392 = vunpack.c.h.b16 %v249
    %v393 = vunpack.c.l.b16 %v250
    %v394 = vunpack.c.h.b16 %v250
    %v395 = vunpack.c.l.b16 %v251
    %v396 = vunpack.c.h.b16 %v251
    %v397 = vunpack.c.l.b16 %v252
    %v398 = vunpack.c.h.b16 %v252
    %v399 = vunpack.c.l.b16 %v253
    %v400 = vunpack.c.h.b16 %v253
    %v401 = vunpack.c.l.b16 %v254
    %v402 = vunpack.c.h.b16 %v254
    %v403 = vunpack.c.l.b16 %v255
    %v404 = vunpack.c.h.b16 %v255
    %v405 = vunpack.c.l.b16 %v256
    %v406 = vunpack.c.h.b16 %v256
    %v407 = vunpack.c.l.b16 %v257
    %v408 = vunpack.c.h.b16 %v257
    %v409 = vunpack.c.l.b16 %v258
    %v410 = vunpack.c.h.b16 %v258
    %v411 = vunpack.c.l.b16 %v259
    %v412 = vunpack.c.h.b16 %v259
    %v413 = vunpack.c.l.b16 %v260
    %v414 = vunpack.c.h.b16 %v260
    %v415 = vunpack.c.l.b16 %v261
    %v416 = vunpack.c.h.b16 %v261
    %v417 = vunpack.c.l.b16 %v262
    %v418 = vunpack.c.h.b16 %v262
    %v419 = vunpack.c.l.b16 %v263
    %v420 = vunpack.c.h.b16 %v263
    %v421 = vunpack.c.l.b16 %v264
    %v422 = vunpack.c.h.b16 %v264
    %v423 = vunpack.c.l.b16 %v265
    %v424 = vunpack.c.h.b16 %v265
    %v425 = vunpack.c.l.b16 %v266
    %v426 = vunpack.c.h.b16 %v266
    %v427 = vunpack.c.l.b16 %v267
    %v428 = vunpack.c.h.b16 %v267
    %v429 = vunpack.c.l.b16 %v268
    %v430 = vunpack.c.h.b16 %v268
    %v431 = vunpack.c.l.b16 %v269
    %v432 = vunpack.c.h.b16 %v269
    %v433 = vunpack.c.l.b16 %v270
    %v434 = vunpack.c.h.b16 %v270
    %v435 = vunpack.c.l.b16 %v271
    %v436 = vunpack.c.h.b16 %v271
    %v437 = vunpack.c.l.b16 %v272
    %v438 = vunpack.c.h.b16 %v272
    %v439 = vunpack.c.l.b16 %v273
    %v440 = vunpack.c.h.b16 %v273
    %v441 = vunpack.c.l.b16 %v274
    %v442 = vunpack.c.h.b16 %v274
    %v443 = vunpack.c.l.b16 %v275
    %v444 = vunpack.c.h.b16 %v275
    %v445 = vunpack.c.l.b16 %v276
    %v446 = vunpack.c.h.b16 %v276
    %v447 = vunpack.c.l.b16 %v277
    %v448 = vunpack.c.h.b16 %v277
    %v449 = vunpack.c.l.b16 %v278
    %v450 = vunpack.c.h.b16 %v278
    %v451 = vunpack.c.l.b16 %v279
    %v452 = vunpack.c.h.b16 %v279
    %v453 = vunpack.c.l.b16 %v280
    %v454 = vunpack.c.h.b16 %v280
    %v455 = vunpack.c.l.b16 %v281
    %v456 = vunpack.c.h.b16 %v281
    %v457 = vunpack.c.l.b16 %v282
    %v458 = vunpack.c.h.b16 %v282
    %v459 = vunpack.c.l.b16 %v283
    %v460 = vunpack.c.h.b16 %v283
    %v461 = vunpack.c.l.b16 %v284
    %v462 = vunpack.c.h.b16 %v284
    %v463 = vunpack.c.l.b16 %v285
    %v464 = vunpack.c.h.b16 %v285
    %v465 = vunpack.c.l.b16 %v286
    %v466 = vunpack.c.h.b16 %v286
    %v467 = vunpack.c.l.b16 %v287
    %v468 = vunpack.c.h.b16 %v287
    %v469 = vunpack.c.l.b16 %v288
    %v470 = vunpack.c.h.b16 %v288
    %v471 = vunpack.c.l.b16 %v289
    %v472 = vunpack.c.h.b16 %v289
    %v473 = vunpack.c.l.b16 %v290
    %v474 = vunpack.c.h.b16 %v290
    %v475 = vunpack.c.l.b16 %v291
    %v476 = vunpack.c.h.b16 %v291
    %v477 = vunpack.c.l.b16 %v292
    %v478 = vunpack.c.h.b16 %v292
    %v479 = vunpack.c.l.b16 %v293
    %v480 = vunpack.c.h.b16 %v293
    %v481 = vunpack.c.l.b16 %v294
    %v482 = vunpack.c.h.b16 %v294
    %v483 = vunpack.c.l.b16 %v295
    %v484 = vunpack.c.h.b16 %v295
    %v485 = vunpack.c.l.b16 %v296
    %v486 = vunpack.c.h.b16 %v296
    %v487 = vunpack.c.l.b16 %v297
    %v488 = vunpack.c.h.b16 %v297
    %v489 = vunpack.c.l.b16 %v298
    %v490 = vunpack.c.h.b16 %v298
    %v491 = vunpack.c.l.b16 %v299
    %v492 = vunpack.c.h.b16 %v299
    %v493 = vunpack.c.l.b16 %v300
    %v494 = vunpack.c.h.b16 %v300
    %v495 = vunpack.c.l.b16 %v301
    %v496 = vunpack.c.h.b16 %v301
    %v497 = vunpack.c.l.b16 %v302
    %v498 = vunpack.c.h.b16 %v302
    %v499 = vunpack.c.l.b16 %v303
    %v500 = vunpack.c.h.b16 %v303
    %v501 = vunpack.c.l.b16 %v304
    %v502 = vunpack.c.h.b16 %v304
    %v503 = vunpack.c.l.b16 %v305
    %v504 = vunpack.c.h.b16 %v305
    %v505 = vunpack.c.l.b16 %v306
    %v506 = vunpack.c.h.b16 %v306
    %v507 = vunpack.c.l.b16 %v307
    %v508 = vunpack.c.h.b16 %v307
    %v509 = vunpack.c.l.b16 %v308
    %v510 = vunpack.c.h.b16 %v308
    %v511 = vunpack.c.l.b16 %v309
    %v512 = vunpack.c.h.b16 %v309
    %v513 = vunpack.c.l.b16 %v310
    %v514 = vunpack.c.h.b16 %v310
    %v515 = vpack.c.b16 %v389, %v387
    %v516 = vpack.c.b16 %v390, %v388
    %v517 = vpack.c.b16 %v393, %v391
    %v518 = vpack.c.b16 %v394, %v392
    %v519 = vpack.c.b16 %v397, %v395
    %v520 = vpack.c.b16 %v398, %v396
    %v521 = vpack.c.b16 %v401, %v399
    %v522 = vpack.c.b16 %v402, %v400
    %v523 = vpack.c.b16 %v405, %v403
    %v524 = vpack.c.b16 %v406, %v404
    %v525 = vpack.c.b16 %v409, %v407
    %v526 = vpack.c.b16 %v410, %v408
    %v527 = vpack.c.b16 %v413, %v411
    %v528 = vpack.c.b16 %v414, %v412
    %v529 = vpack.c.b16 %v417, %v415
    %v530 = vpack.c.b16 %v418, %v416
    %v531 = vpack.c.b16 %v421, %v419
    %v532 = vpack.c.b16 %v422, %v420
    %v533 = vpack.c.b16 %v425, %v423
    %v534 = vpack.c.b16 %v426, %v424
    %v535 = vpack.c.b16 %v429, %v427
    %v536 = vpack.c.b16 %v430, %v428
    %v537 = vpack.c.b16 %v433, %v431
    %v538 = vpack.c.b16 %v434, %v432
    %v539 = vpack.c.b16 %v437, %v435
    %v540 = vpack.c.b16 %v438, %v436
    %v541 = vpack.c.b16 %v441, %v439
    %v542 = vpack.c.b16 %v442, %v440
    %v543 = vpack.c.b16 %v445, %v443
    %v544 = vpack.c.b16 %v446, %v444
    %v545 = vpack.c.b16 %v449, %v447
    %v546 = vpack.c.b16 %v450, %v448
    %v547 = vpack.c.b16 %v453, %v451
    %v548 = vpack.c.b16 %v454, %v452
    %v549 = vpack.c.b16 %v457, %v455
    %v550 = vpack.c.b16 %v458, %v456
    %v551 = vpack.c.b16 %v461, %v459
    %v552 = vpack.c.b16 %v462, %v460
    %v553 = vpack.c.b16 %v465, %v463
    %v554 = vpack.c.b16 %v466, %v464
    %v555 = vpack.c.b16 %v469, %v467
    %v556 = vpack.c.b16 %v470, %v468
    %v557 = vpack.c.b16 %v473, %v471
    %v558 = vpack.c.b16 %v474, %v472
    %v559 = vpack.c.b16 %v477, %v475
    %v560 = vpack.c.b16 %v478, %v476
    %v561 = vpack.c.b16 %v481, %v479
    %v562 = vpack.c.b16 %v482, %v480
    %v563 = vpack.c.b16 %v485, %v483
    %v564 = vpack.c.b16 %v486, %v484
    %v565 = vpack.c.b16 %v489, %v487
    %v566 = vpack.c.b16 %v490, %v488
    %v567 = vpack.c.b16 %v493, %v491
    %v568 = vpack.c.b16 %v494, %v492
    %v569 = vpack.c.b16 %v497, %v495
    %v570 = vpack.c.b16 %v498, %v496
    %v571 = vpack.c.b16 %v501, %v499
    %v572 = vpack.c.b16 %v502, %v500
    %v573 = vpack.c.b16 %v505, %v503
    %v574 = vpack.c.b16 %v506, %v504
    %v575 = vpack.c.b16 %v509, %v507
    %v576 = vpack.c.b16 %v510, %v508
    %v577 = vpack.c.b16 %v513, %v511
    %v578 = vpack.c.b16 %v514, %v512
    %643 = vmatprep.subr.bf16.mxu0 %v516
    %644 = vmatpush1.bf16.msra.mxu0 %v515
    %645 = vmatprep.subr.bf16.mxu0 %v518
    %646 = vmatpush1.bf16.msra.mxu0 %v517
    %647 = vmatprep.subr.bf16.mxu0 %v520
    %648 = vmatpush1.bf16.msra.mxu0 %v519
    %649 = vmatprep.subr.bf16.mxu0 %v522
    %650 = vmatpush1.bf16.msra.mxu0 %v521
    %651 = vmatprep.subr.bf16.mxu0 %v524
    %652 = vmatpush1.bf16.msra.mxu0 %v523
    %653 = vmatprep.subr.bf16.mxu0 %v526
    %654 = vmatpush1.bf16.msra.mxu0 %v525
    %655 = vmatprep.subr.bf16.mxu0 %v528
    %656 = vmatpush1.bf16.msra.mxu0 %v527
    %657 = vmatprep.subr.bf16.mxu0 %v530
    %658 = vmatpush1.bf16.msra.mxu0 %v529
    %659 = vmatprep.subr.bf16.mxu0 %v532
    %660 = vmatpush1.bf16.msra.mxu0 %v531
    %661 = vmatprep.subr.bf16.mxu0 %v534
    %662 = vmatpush1.bf16.msra.mxu0 %v533
    %663 = vmatprep.subr.bf16.mxu0 %v536
    %664 = vmatpush1.bf16.msra.mxu0 %v535
    %665 = vmatprep.subr.bf16.mxu0 %v538
    %666 = vmatpush1.bf16.msra.mxu0 %v537
    %667 = vmatprep.subr.bf16.mxu0 %v540
    %668 = vmatpush1.bf16.msra.mxu0 %v539
    %669 = vmatprep.subr.bf16.mxu0 %v542
    %670 = vmatpush1.bf16.msra.mxu0 %v541
    %671 = vmatprep.subr.bf16.mxu0 %v544
    %672 = vmatpush1.bf16.msra.mxu0 %v543
    %673 = vmatprep.subr.bf16.mxu0 %v546
    %674 = vmatpush1.bf16.msra.mxu0 %v545
    %675 = vmatprep.mubr.bf16.mxu0 %v244
    %676 = vmatmul.mubr.bf16.gmra.mrb[0].mxu0 %v243
    %v677 = vpop.f32.mrb[0].mxu0
    %v678 = vadd.f32 %v316, %v677
    %v679 = vpop.f32.mrb[0].mxu0
    %v680 = vadd.f32 %v320, %v679
    %v681 = vpop.f32.mrb[0].mxu0
    %v682 = vpop.f32.mrb[0].mxu0
    %683 = vdwg.mxu0
    %684 = vmatprep.subr.bf16.mxu0 %v548
    %685 = vmatpush1.bf16.msra.mxu0 %v547
    %686 = vmatprep.subr.bf16.mxu0 %v550
    %687 = vmatpush1.bf16.msra.mxu0 %v549
    %688 = vmatprep.subr.bf16.mxu0 %v552
    %689 = vmatpush1.bf16.msra.mxu0 %v551
    %690 = vmatprep.subr.bf16.mxu0 %v554
    %691 = vmatpush1.bf16.msra.mxu0 %v553
    %692 = vmatprep.subr.bf16.mxu0 %v556
    %693 = vmatpush1.bf16.msra.mxu0 %v555
    %694 = vmatprep.subr.bf16.mxu0 %v558
    %695 = vmatpush1.bf16.msra.mxu0 %v557
    %696 = vmatprep.subr.bf16.mxu0 %v560
    %697 = vmatpush1.bf16.msra.mxu0 %v559
    %698 = vmatprep.subr.bf16.mxu0 %v562
    %699 = vmatpush1.bf16.msra.mxu0 %v561
    %700 = vmatprep.subr.bf16.mxu0 %v564
    %701 = vmatpush1.bf16.msra.mxu0 %v563
    %702 = vmatprep.subr.bf16.mxu0 %v566
    %703 = vmatpush1.bf16.msra.mxu0 %v565
    %704 = vmatprep.subr.bf16.mxu0 %v568
    %705 = vmatpush1.bf16.msra.mxu0 %v567
    %706 = vmatprep.subr.bf16.mxu0 %v570
    %707 = vmatpush1.bf16.msra.mxu0 %v569
    %708 = vmatprep.subr.bf16.mxu0 %v572
    %709 = vmatpush1.bf16.msra.mxu0 %v571
    %710 = vmatprep.subr.bf16.mxu0 %v574
    %711 = vmatpush1.bf16.msra.mxu0 %v573
    %712 = vmatprep.subr.bf16.mxu0 %v576
    %713 = vmatpush1.bf16.msra.mxu0 %v575
    %714 = vmatprep.subr.bf16.mxu0 %v578
    %715 = vmatpush1.bf16.msra.mxu0 %v577
    %716 = vmatprep.mubr.bf16.mxu0 %v246
    %717 = vmatmul.mubr.bf16.gmra.mrb[0].mxu0 %v245
    %v718 = vpop.f32.mrb[0].mxu0
    %v719 = vadd.f32 %v678, %v718
    %v720 = vpop.f32.mrb[0].mxu0
    %v721 = vadd.f32 %v680, %v720
    %v722 = vpop.f32.mrb[0].mxu0
    %v723 = vpop.f32.mrb[0].mxu0
    %724 = vdwg.mxu0
    %v725 = vmax.f32 %v719, 0.0
    %v726 = vmax.f32 %v721, 0.0
    %v727 = vpack.c.bf16 %v725, %v725
    %v728 = vpack.c.bf16 %v726, %v726
    %v729 = vld [vmem:[#allocation8] sm:$0xf]
    %v730 = vld [vmem:[#allocation8 + $0x4] sm:$0xf]
    %v731 = vld [vmem:[#allocation8 + $0x8] sm:$0xf]
    %v732 = vld [vmem:[#allocation8 + $0xc] sm:$0xf]
    %v733 = vld [vmem:[#allocation8 + $0x10] sm:$0xf]
    %v734 = vld [vmem:[#allocation8 + $0x14] sm:$0xf]
    %v735 = vld [vmem:[#allocation8 + $0x18] sm:$0xf]
    %v736 = vld [vmem:[#allocation8 + $0x1c] sm:$0xf]
    %v737 = vld [vmem:[#allocation8 + $0x20] sm:$0xf]
    %v738 = vld [vmem:[#allocation8 + $0x24] sm:$0xf]
    %v739 = vld [vmem:[#allocation8 + $0x28] sm:$0xf]
    %v740 = vld [vmem:[#allocation8 + $0x2c] sm:$0xf]
    %v741 = vld [vmem:[#allocation8 + $0x30] sm:$0xf]
    %v742 = vld [vmem:[#allocation8 + $0x34] sm:$0xf]
    %v743 = vld [vmem:[#allocation8 + $0x38] sm:$0xf]
    %v744 = vld [vmem:[#allocation8 + $0x3c] sm:$0xf]
    %v745 = vld [vmem:[#allocation8 + $0x40] sm:$0xf]
    %v746 = vld [vmem:[#allocation8 + $0x44] sm:$0xf]
    %v747 = vld [vmem:[#allocation8 + $0x48] sm:$0xf]
    %v748 = vld [vmem:[#allocation8 + $0x4c] sm:$0xf]
    %v749 = vld [vmem:[#allocation8 + $0x50] sm:$0xf]
    %v750 = vld [vmem:[#allocation8 + $0x54] sm:$0xf]
    %v751 = vld [vmem:[#allocation8 + $0x58] sm:$0xf]
    %v752 = vld [vmem:[#allocation8 + $0x5c] sm:$0xf]
    %v753 = vld [vmem:[#allocation8 + $0x60] sm:$0xf]
    %v754 = vld [vmem:[#allocation8 + $0x64] sm:$0xf]
    %v755 = vld [vmem:[#allocation8 + $0x68] sm:$0xf]
    %v756 = vld [vmem:[#allocation8 + $0x6c] sm:$0xf]
    %v757 = vld [vmem:[#allocation8 + $0x70] sm:$0xf]
    %v758 = vld [vmem:[#allocation8 + $0x74] sm:$0xf]
    %v759 = vld [vmem:[#allocation8 + $0x78] sm:$0xf]
    %v760 = vld [vmem:[#allocation8 + $0x7c] sm:$0xf]
    %v761 = vld [vmem:[%s6] sm:$0x1]
    %v763 = vlaneseq
    %v764 = vshrl.u32 %v763, 7
    %v765 = vsub.s32 0, %v764
    %v766 = vrot.slane %v761, %v765
    %v800 = vunpack.c.l.b16 %v729
    %v801 = vunpack.c.l.b16 %v730
    %v802 = vunpack.c.l.b16 %v731
    %v803 = vunpack.c.l.b16 %v732
    %v804 = vunpack.c.l.b16 %v733
    %v805 = vunpack.c.l.b16 %v734
    %v806 = vunpack.c.l.b16 %v735
    %v807 = vunpack.c.l.b16 %v736
    %v808 = vunpack.c.l.b16 %v737
    %v809 = vunpack.c.l.b16 %v738
    %v810 = vunpack.c.l.b16 %v739
    %v811 = vunpack.c.l.b16 %v740
    %v812 = vunpack.c.l.b16 %v741
    %v813 = vunpack.c.l.b16 %v742
    %v814 = vunpack.c.l.b16 %v743
    %v815 = vunpack.c.l.b16 %v744
    %v816 = vunpack.c.l.b16 %v745
    %v817 = vunpack.c.l.b16 %v746
    %v818 = vunpack.c.l.b16 %v747
    %v819 = vunpack.c.l.b16 %v748
    %v820 = vunpack.c.l.b16 %v749
    %v821 = vunpack.c.l.b16 %v750
    %v822 = vunpack.c.l.b16 %v751
    %v823 = vunpack.c.l.b16 %v752
    %v824 = vunpack.c.l.b16 %v753
    %v825 = vunpack.c.l.b16 %v754
    %v826 = vunpack.c.l.b16 %v755
    %v827 = vunpack.c.l.b16 %v756
    %v828 = vunpack.c.l.b16 %v757
    %v829 = vunpack.c.l.b16 %v758
    %v830 = vunpack.c.l.b16 %v759
    %v831 = vunpack.c.l.b16 %v760
    %v832 = vpack.c.b16 %v801, %v800
    %v833 = vpack.c.b16 %v803, %v802
    %v834 = vpack.c.b16 %v805, %v804
    %v835 = vpack.c.b16 %v807, %v806
    %v836 = vpack.c.b16 %v809, %v808
    %v837 = vpack.c.b16 %v811, %v810
    %v838 = vpack.c.b16 %v813, %v812
    %v839 = vpack.c.b16 %v815, %v814
    %v840 = vpack.c.b16 %v817, %v816
    %v841 = vpack.c.b16 %v819, %v818
    %v842 = vpack.c.b16 %v821, %v820
    %v843 = vpack.c.b16 %v823, %v822
    %v844 = vpack.c.b16 %v825, %v824
    %v845 = vpack.c.b16 %v827, %v826
    %v846 = vpack.c.b16 %v829, %v828
    %v847 = vpack.c.b16 %v831, %v830
    %864 = vmatprep.subr.bf16.mxu0 0
    %865 = vmatpush1.bf16.msra.mxu0 %v832
    %866 = vmatprep.subr.bf16.mxu0 0
    %867 = vmatpush1.bf16.msra.mxu0 %v833
    %868 = vmatprep.subr.bf16.mxu0 0
    %869 = vmatpush1.bf16.msra.mxu0 %v834
    %870 = vmatprep.subr.bf16.mxu0 0
    %871 = vmatpush1.bf16.msra.mxu0 %v835
    %872 = vmatprep.subr.bf16.mxu0 0
    %873 = vmatpush1.bf16.msra.mxu0 %v836
    %874 = vmatprep.subr.bf16.mxu0 0
    %875 = vmatpush1.bf16.msra.mxu0 %v837
    %876 = vmatprep.subr.bf16.mxu0 0
    %877 = vmatpush1.bf16.msra.mxu0 %v838
    %878 = vmatprep.subr.bf16.mxu0 0
    %879 = vmatpush1.bf16.msra.mxu0 %v839
    %880 = vmatprep.subr.bf16.mxu0 0
    %881 = vmatpush1.bf16.msra.mxu0 %v840
    %882 = vmatprep.subr.bf16.mxu0 0
    %883 = vmatpush1.bf16.msra.mxu0 %v841
    %884 = vmatprep.subr.bf16.mxu0 0
    %885 = vmatpush1.bf16.msra.mxu0 %v842
    %886 = vmatprep.subr.bf16.mxu0 0
    %887 = vmatpush1.bf16.msra.mxu0 %v843
    %888 = vmatprep.subr.bf16.mxu0 0
    %889 = vmatpush1.bf16.msra.mxu0 %v844
    %890 = vmatprep.subr.bf16.mxu0 0
    %891 = vmatpush1.bf16.msra.mxu0 %v845
    %892 = vmatprep.subr.bf16.mxu0 0
    %893 = vmatpush1.bf16.msra.mxu0 %v846
    %894 = vmatprep.subr.bf16.mxu0 0
    %895 = vmatpush1.bf16.msra.mxu0 %v847
    %896 = vmatprep.mubr.bf16.mxu0 %v728
    %897 = vmatmul.mubr.bf16.gmra.mrb[0].mxu0 %v727
    %v898 = vpop.f32.mrb[0].mxu0
    %v899 = vadd.f32 %v766, %v898
    %v900 = vpop.f32.mrb[0].mxu0
    %v901 = vpop.f32.mrb[0].mxu0
    %v902 = vpop.f32.mrb[0].mxu0
    %903 = vdwg.mxu0
    %904 = vst [vmem:[#allocation10] sm:$0xff] %v899
    // Predicated region
    $region46: #{tpu_custom_call.1} parent=1 // pred_check
      _
    $region47: #{tpu_custom_call.1} parent=1 // pred_check_branch
      %906 = sbr.rel (0) target = $region49
    $region48: #{tpu_custom_call.1} parent=1 // pred_region
      %s908 = ssub.s32 128, 128
      %909 = vsyncadd [#allocation4], %s908
      %s911 = sshll.u32 [#allocation10], 4
      %s912 = int_to_ptr.vmem [resolvable:$true] %s911
      %914 = dma.vmem_to_hbm [thread:$0]  %s912, 128, %s7, [#allocation4]
    $region49: #{tpu_custom_call.1} parent=1 // pred_fallthru
      _
    // Predicated region
    $region50: #{tpu_custom_call.1} parent=1 // pred_check
      _
    $region51: #{tpu_custom_call.1} parent=1 // pred_check_branch
      %916 = sbr.rel (0) target = $region53
    $region52: #{tpu_custom_call.1} parent=1 // pred_region
      %917 = dma.done [#allocation4], 128
    $region53: #{tpu_custom_call.1} parent=1 // pred_fallthru
      _
    %918 = vsyncpa [#allocation3], 1
    %919 = vsyncpa [#allocation6], 1
    %920 = vsyncpa [#allocation9], 1
    %921 = vsyncpa [#allocation4], 1

</llo_original>
